<compile_context>
chip_gen: v6e
topology: v6e:2x2x1
jax: 0.10.0
libtpu: 0.0.40
codegen_flags: <defaults>
</compile_context>

<pallas_src>
import jax
import jax.numpy as jnp
from jax.experimental import pallas as pl
from jax.experimental.pallas import tpu as pltpu


def _round_up(n: int, m: int) -> int:
    return ((n + m - 1) // m) * m


def _round_down(n: int, m: int) -> int:
    return (n // m) * m


def _vmem_capacity_bytes() -> int:
    """Physical VMEM per TensorCore; conservative fallback if unavailable."""
    try:
        info = pltpu.get_tpu_info()
        cap = getattr(info, "vmem_capacity_bytes", None)
        if cap:
            return int(cap)
    except Exception:
        pass
    return 64 * 1024 * 1024  # v7x per-TC size: safe lower bound everywhere


# ----------------------------- Pallas kernel ------------------------------ #

def _merging_linear_kernel(x_ref, w_ref, o_ref):
    # x_ref: (tm, K) activation tile (bf16/f32)
    # w_ref: (K, tn) weight tile (K, D layout -> canonical MXU contraction)
    # o_ref: (tm, tn) output tile, written from the f32 accumulator
    o_ref[...] = jnp.dot(
        x_ref[...], w_ref[...], preferred_element_type=jnp.float32
    ).astype(o_ref.dtype)


def merging_linear_pallas(x: jax.Array, weight: jax.Array, *,
                          out_dtype=None, tm: int | None = None,
                          vmem_limit_bytes: int | None = None) -> jax.Array:
    """Computes x @ weight with a Pallas TPU kernel.

    x:      (N, K)   activations (bf16 recommended)
    weight: (K, D)   pre-transposed merging weight (see prepare_merging_weight)
    returns (N, D) in out_dtype (default x.dtype), accumulated in f32.
    """
    N, K = x.shape
    K2, D = weight.shape
    assert K == K2
    out_dtype = x.dtype if out_dtype is None else out_dtype

    xb = jnp.dtype(x.dtype).itemsize
    wb = jnp.dtype(weight.dtype).itemsize
    ob = jnp.dtype(out_dtype).itemsize

    # Native sublane packing: 8 rows for 4-byte, 16 for 2-byte, 32 for 1-byte.
    pack = max(8, 32 // xb)

    cap = _vmem_capacity_bytes()
    if vmem_limit_bytes is None:
        vmem_limit_bytes = min(96 * 1024 * 1024, (cap * 3) // 4)
    budget = (vmem_limit_bytes * 3) // 4  # headroom for compiler scratch

    # Output-column tile: keep the whole weight resident if it fits (grid_d=1,
    # constant weight block index -> DMA'd from HBM exactly once); otherwise
    # fall back to the largest 128-multiple chunk that fits half the budget.
    if D <= 128 or 2 * K * D * wb <= budget // 2:
        tn = D
    else:
        tn = min(D, max(128, _round_down((budget // 2) // (2 * K * wb), 128)))

    # Row tile: as large as the remaining budget allows (amortizes grid-step
    # overhead, raises arithmetic intensity), rounded to the sublane packing.
    if tm is None:
        tm = 1024
    tm_cap = (budget - 2 * K * tn * wb) // (2 * (K * xb + tn * ob))
    tm = max(pack, min(tm, _round_down(max(tm_cap, pack), pack)))
    if N <= tm:
        tm = N  # single full-extent block: always layout-legal, even N < 8

    grid = (pl.cdiv(N, tm), pl.cdiv(D, tn))  # D innermost -> x block resident

    return pl.pallas_call(
        _merging_linear_kernel,
        out_shape=jax.ShapeDtypeStruct((N, D), out_dtype),
        grid=grid,
        in_specs=[
            pl.BlockSpec((tm, K), lambda i, j: (i, 0)),
            pl.BlockSpec((K, tn), lambda i, j: (0, j)),
        ],
        out_specs=pl.BlockSpec((tm, tn), lambda i, j: (i, j)),
        compiler_params=pltpu.CompilerParams(
            dimension_semantics=("parallel", "parallel"),
            vmem_limit_bytes=int(vmem_limit_bytes),
        ),
    )(x, weight)


# ------------------------ Weight prep (one-time) --------------------------- #

def prepare_merging_weight(weight: jax.Array, *, vision_hidden_size: int,
                           spatial_merge_size: int) -> jax.Array:
    """One-time transform of nn.Linear(K, D).weight (shape (D, K)) into the
    (K, D) layout used by the kernel, with torch-unfold's channel-major K
    permutation folded in so activations can be regrouped with a cheap
    contiguous layout.

    torch unfold feature order:   k = c*s*s + ki*s + kj
    natural (contiguous) order:   k = ki*s*d + kj*d + c
    """
    d, s = vision_hidden_size, spatial_merge_size
    D, K = weight.shape
    assert K == d * s * s
    return (
        weight.reshape(D, d, s, s)      # (D, c, ki, kj)  torch-unfold K order
        .transpose(2, 3, 1, 0)          # (ki, kj, c, D)  contiguous K order, D last
        .reshape(s * s * d, D)          # (K, D)
    )


# --------------------------- Module (JAX glue) ----------------------------- #

def mistral3_patch_merger(
    image_features: jax.Array,          # (total_tokens, d)
    image_sizes,                        # sequence of (H_px, W_px) python ints
    merging_weight: jax.Array,          # (s*s*d, d), from prepare_merging_weight
    *,
    spatial_merge_size: int,
    patch_size: int,
    compute_dtype=jnp.bfloat16,
) -> jax.Array:
    """Forward pass equivalent to Mistral3PatchMerger.forward.

    image_sizes must be static (python ints) since token counts determine
    array shapes; the PyTorch module also consumes them as scalars.
    """
    d = image_features.shape[-1]
    s = spatial_merge_size

    grid_sizes = [(H // patch_size, W // patch_size) for (H, W) in image_sizes]

    chunks = []
    offset = 0
    for (h, w) in grid_sizes:
        assert h % s == 0 and w % s == 0, (
            "patch grid must be divisible by spatial_merge_size")
        n_tok = h * w
        tok = image_features[offset: offset + n_tok].reshape(h, w, d)
        offset += n_tok
        # Contiguous regrouping: only axes 1<->2 swapped, i.e. copies of
        # contiguous (s*d)-length row slices.  The unfold channel-major
        # permutation is folded into the weight (prepare_merging_weight).
        g = (
            tok.reshape(h // s, s, w // s, s, d)
            .transpose(0, 2, 1, 3, 4)
            .reshape((h // s) * (w // s), s * s * d)
        )
        chunks.append(g)

    # TODO(synk): fuse this regroup + concat into the pallas_call via
    # PrefetchScalarGridSpec (scalar-prefetched row/offset tables + in-kernel
    # DMA of the contiguous (s*d)-length slices) to remove one full HBM
    # round trip of the activations.
    x = jnp.concatenate(chunks, axis=0).astype(compute_dtype)   # (N, s*s*d)
    w = merging_weight.astype(compute_dtype)                    # (s*s*d, d)
    return merging_linear_pallas(x, w, out_dtype=image_features.dtype)


# --------------------------------- Demo ------------------------------------ #

if __name__ == "__main__":
    vision_hidden_size = 32
    spatial_merge_size = 2
    patch_size = 16

    # Two images: patch grids (4,4) and (2,4) -> 24 tokens, 6 merged tokens.
    image_sizes = [(64, 64), (32, 64)]
    total_tokens = sum(
        (H // patch_size) * (W // patch_size) for (H, W) in image_sizes
    )

    key = jax.random.PRNGKey(0)
    k_feat, k_w = jax.random.split(key)

    image_features = jax.random.normal(
        k_feat, (total_tokens, vision_hidden_size), dtype=jnp.float32
    )
    # nn.Linear(d*s*s, d, bias=False).weight has shape (d, d*s*s)
    in_features = vision_hidden_size * spatial_merge_size ** 2
    weight = (
        jax.random.normal(
            k_w, (vision_hidden_size, in_features), dtype=jnp.float32
        )
        * (in_features ** -0.5)
    )

    # One-time weight permutation + transpose (checkpoint-load time).
    merging_weight = prepare_merging_weight(
        weight,
        vision_hidden_size=vision_hidden_size,
        spatial_merge_size=spatial_merge_size,
    )

    out = mistral3_patch_merger(
        image_features,
        image_sizes,
        merging_weight,
        spatial_merge_size=spatial_merge_size,
        patch_size=patch_size,
        compute_dtype=jnp.bfloat16,
    )
    out = jax.block_until_ready(out)

    # Pure-JAX reference with torch-unfold semantics and the ORIGINAL (D, K)
    # weight, using the same bf16 operand precision / f32 accumulation.
    def _ref(feats, w_orig):
        d = feats.shape[-1]
        s = spatial_merge_size
        rows = []
        off = 0
        for (H, W) in image_sizes:
            h, w = H // patch_size, W // patch_size
            t = feats[off: off + h * w].reshape(h, w, d)
            off += h * w
            g = (
                t.reshape(h // s, s, w // s, s, d)
                .transpose(0, 2, 4, 1, 3)            # unfold channel-major order
                .reshape((h // s) * (w // s), d * s * s)
            )
            rows.append(g)
        xx = jnp.concatenate(rows, axis=0).astype(jnp.bfloat16)
        wb = w_orig.astype(jnp.bfloat16)
        return jnp.dot(xx, wb.T, preferred_element_type=jnp.float32)

    ref = _ref(image_features, weight)
    assert out.shape == ref.shape, (out.shape, ref.shape)
    assert jnp.allclose(out, ref, atol=2e-3, rtol=2e-3)

    print("KERNEL_OK")
</pallas_src>

<mosaic_0001>
module attributes {stable_mosaic.version = 11 : i64} {
  func.func @_merging_linear_kernel(%arg0: i32, %arg1: i32, %arg2: memref<6x128xbf16, #tpu.memory_space<vmem>>, %arg3: memref<128x32xbf16, #tpu.memory_space<vmem>>, %arg4: memref<6x32xf32, #tpu.memory_space<vmem>>) attributes {dimension_semantics = [#tpu.dimension_semantics<parallel>, #tpu.dimension_semantics<parallel>], iteration_bounds = array<i64: 1, 1>, scalar_prefetch = 0 : i64, scratch_operands = 0 : i64, tpu.core_type = #tpu.core_type<tc>, window_params = [{transform_indices = @transform_0, window_bounds = array<i64: 6, 128>}, {transform_indices = @transform_1, window_bounds = array<i64: 128, 32>}, {transform_indices = @transform_2, window_bounds = array<i64: 6, 32>}]} {
    %c0 = arith.constant 0 : index
    %c0_0 = arith.constant 0 : index
    %0 = vector.load %arg2[%c0, %c0_0] : memref<6x128xbf16, #tpu.memory_space<vmem>>, vector<6x128xbf16>
    %c0_1 = arith.constant 0 : index
    %c0_2 = arith.constant 0 : index
    %1 = vector.load %arg3[%c0_1, %c0_2] : memref<128x32xbf16, #tpu.memory_space<vmem>>, vector<128x32xbf16>
    %cst = arith.constant dense<0.000000e+00> : vector<6x32xf32>
    %2 = tpu.matmul %0, %1, %cst {dimension_numbers = #tpu.dot_dimension_numbers<[1], [0], [0], [1], [0, 0, 1, 1], [], []>} : vector<6x128xbf16>, vector<128x32xbf16>, vector<6x32xf32> -> vector<6x32xf32>
    %c0_3 = arith.constant 0 : index
    %c0_4 = arith.constant 0 : index
    %3 = vector.load %arg4[%c0_3, %c0_4] : memref<6x32xf32, #tpu.memory_space<vmem>>, vector<6x32xf32>
    tpu.vector_store %arg4[%c0_3, %c0_4], %2 {strides = array<i32>} : memref<6x32xf32, #tpu.memory_space<vmem>>, vector<6x32xf32>,
    return
  }
  func.func @transform_0(%arg0: i32, %arg1: i32) -> (i32, i32) {
    %c0_i32 = arith.constant 0 : i32
    %c0_i32_0 = arith.constant 0 : i32
    return %arg0, %c0_i32 : i32, i32
  }
  func.func @transform_1(%arg0: i32, %arg1: i32) -> (i32, i32) {
    %c0_i32 = arith.constant 0 : i32
    %c0_i32_0 = arith.constant 0 : i32
    return %c0_i32, %arg1 : i32, i32
  }
  func.func @transform_2(%arg0: i32, %arg1: i32) -> (i32, i32) {
    %c0_i32 = arith.constant 0 : i32
    return %arg0, %arg1 : i32, i32
  }
}

</mosaic_0001>

<llo_original>
// kernel: tpu_custom_call.1
$region0: #{tpu_custom_call.1}
  #allocation0 [shape = 'u32[]', space=smem, size = 0x4, offset = 0x4, fixed_abs, tag = 'smem constant byte address 0x4 - core index']
  #allocation1 [shape = 'u32[144,128]{1,0:T(1,128)}', space=vmem, size = 0x12000, scoped, tag = 'internal scratch']
  %s0 = inlined_call_operand.vmem [shape: bf16[6,128], index: 0, kind: input, shape index: {}]
  %s1 = inlined_call_operand.vmem [shape: bf16[128,32], index: 1, kind: input, shape index: {}]
  %s2 = inlined_call_operand.hbm [shape: f32[6,32], index: 2, kind: output, shape index: {}]
  %s3 = sld [smem:[#allocation0]]
  $region18: #{tpu_custom_call.1} parent=0
    _
  %s5 = ssub.s32 1, %s3
  %s6 = scalar_select 0, %s5, %s3
  $region1: #{tpu_custom_call.1} parent=0
    #allocation2 [shape = 'u8[4096]{0}', space=vmem, size = 0x1000, scoped, tag = 'output window, operand 0, single buffered']
    #allocation3 [shape = 's32[1]{0}', space=sflag, size = 0x4, scoped, tag = 'scoped memory for tpu_custom_call.1']
    %7 = vsyncpa [#allocation3], 0
    // Predicated region
    $region2: #{tpu_custom_call.1} parent=1 // pred_check
      _
    $region3: #{tpu_custom_call.1} parent=1 // pred_check_branch
      %9 = sbr.rel (0) target = $region5
    $region4: #{tpu_custom_call.1} parent=1 // pred_region
      _
    $region5: #{tpu_custom_call.1} parent=1 // pred_fallthru
      _
    // Predicated region
    $region6: #{tpu_custom_call.1} parent=1 // pred_check
      _
    $region7: #{tpu_custom_call.1} parent=1 // pred_check_branch
      %11 = sbr.rel (0) target = $region9
    $region8: #{tpu_custom_call.1} parent=1 // pred_region
      _
    $region9: #{tpu_custom_call.1} parent=1 // pred_fallthru
      _
    %v13 = vld [vmem:[%s0] sm:$0x7]
    %v14 = vld [vmem:[%s1] sm:$0xf]
    %v15 = vld [vmem:[%s1 + $0x4] sm:$0xf]
    %v16 = vld [vmem:[%s1 + $0x8] sm:$0xf]
    %v17 = vld [vmem:[%s1 + $0xc] sm:$0xf]
    %v18 = vld [vmem:[%s1 + $0x10] sm:$0xf]
    %v19 = vld [vmem:[%s1 + $0x14] sm:$0xf]
    %v20 = vld [vmem:[%s1 + $0x18] sm:$0xf]
    %v21 = vld [vmem:[%s1 + $0x1c] sm:$0xf]
    %v22 = vld [vmem:[%s1 + $0x20] sm:$0xf]
    %v23 = vld [vmem:[%s1 + $0x24] sm:$0xf]
    %v24 = vld [vmem:[%s1 + $0x28] sm:$0xf]
    %v25 = vld [vmem:[%s1 + $0x2c] sm:$0xf]
    %v26 = vld [vmem:[%s1 + $0x30] sm:$0xf]
    %v27 = vld [vmem:[%s1 + $0x34] sm:$0xf]
    %v28 = vld [vmem:[%s1 + $0x38] sm:$0xf]
    %v29 = vld [vmem:[%s1 + $0x3c] sm:$0xf]
    %v46 = vunpack.c.l.b16 %v14
    %v47 = vunpack.c.l.b16 %v15
    %v48 = vunpack.c.l.b16 %v16
    %v49 = vunpack.c.l.b16 %v17
    %v50 = vunpack.c.l.b16 %v18
    %v51 = vunpack.c.l.b16 %v19
    %v52 = vunpack.c.l.b16 %v20
    %v53 = vunpack.c.l.b16 %v21
    %v54 = vunpack.c.l.b16 %v22
    %v55 = vunpack.c.l.b16 %v23
    %v56 = vunpack.c.l.b16 %v24
    %v57 = vunpack.c.l.b16 %v25
    %v58 = vunpack.c.l.b16 %v26
    %v59 = vunpack.c.l.b16 %v27
    %v60 = vunpack.c.l.b16 %v28
    %v61 = vunpack.c.l.b16 %v29
    %v62 = vpack.c.b16 %v47, %v46
    %v63 = vpack.c.b16 %v49, %v48
    %v64 = vpack.c.b16 %v51, %v50
    %v65 = vpack.c.b16 %v53, %v52
    %v66 = vpack.c.b16 %v55, %v54
    %v67 = vpack.c.b16 %v57, %v56
    %v68 = vpack.c.b16 %v59, %v58
    %v69 = vpack.c.b16 %v61, %v60
    %78 = vmatprep.subr.bf16.mxu0 0
    %79 = vmatpush1.bf16.msra.mxu0 %v69
    %80 = vmatprep.subr.bf16.mxu0 0
    %81 = vmatpush1.bf16.msra.mxu0 %v68
    %82 = vmatprep.subr.bf16.mxu0 0
    %83 = vmatpush1.bf16.msra.mxu0 %v67
    %84 = vmatprep.subr.bf16.mxu0 0
    %85 = vmatpush1.bf16.msra.mxu0 %v66
    %86 = vmatprep.subr.bf16.mxu0 0
    %87 = vmatpush1.bf16.msra.mxu0 %v65
    %88 = vmatprep.subr.bf16.mxu0 0
    %89 = vmatpush1.bf16.msra.mxu0 %v64
    %90 = vmatprep.subr.bf16.mxu0 0
    %91 = vmatpush1.bf16.msra.mxu0 %v63
    %92 = vmatprep.subr.bf16.mxu0 0
    %93 = vmatpush1.bf16.msra.mxu0 %v62
    %94 = vmatprep.subr.bf16.mxu0 0
    %95 = vmatpush2.bf16.msra.mxu0 0
    %96 = vmatprep.subr.bf16.mxu0 0
    %97 = vmatpush2.bf16.msra.mxu0 0
    %98 = vmatprep.subr.bf16.mxu0 0
    %99 = vmatpush2.bf16.msra.mxu0 0
    %100 = vmatprep.subr.bf16.mxu0 0
    %101 = vmatpush2.bf16.msra.mxu0 0
    %102 = vmatprep.subr.bf16.mxu0 0
    %103 = vmatpush2.bf16.msra.mxu0 0
    %104 = vmatprep.subr.bf16.mxu0 0
    %105 = vmatpush2.bf16.msra.mxu0 0
    %106 = vmatprep.subr.bf16.mxu0 0
    %107 = vmatpush2.bf16.msra.mxu0 0
    %108 = vmatprep.subr.bf16.mxu0 0
    %109 = vmatpush2.bf16.msra.mxu0 0
    %110 = vmatprep.mubr.bf16.mxu0 0
    %111 = vmatmul.mubr.bf16.gmra.mxu0 %v13
    %v112 = vpop.f32.mrf.mxu0
    %v113 = vadd.f32 0.0, %v112
    %v114 = vpop.f32.mrf.mxu0
    %v115 = vpop.f32.mrf.mxu0
    %v116 = vpop.f32.mrf.mxu0
    %117 = vdwg.mxu0
    %vm118 = vcmask 259072
    %119 = vst.msk [vmem:[#allocation2] sm:$0x3f] %vm118, %v113
    // Predicated region
    $region10: #{tpu_custom_call.1} parent=1 // pred_check
      _
    $region11: #{tpu_custom_call.1} parent=1 // pred_check_branch
      %121 = sbr.rel (0) target = $region13
    $region12: #{tpu_custom_call.1} parent=1 // pred_region
      %s123 = ssub.s32 128, 128
      %124 = vsyncadd [#allocation3], %s123
      %s126 = sshll.u32 [#allocation2], 4
      %s127 = int_to_ptr.vmem [resolvable:$true] %s126
      %129 = dma.vmem_to_hbm [thread:$0]  %s127, 128, %s2, [#allocation3]
    $region13: #{tpu_custom_call.1} parent=1 // pred_fallthru
      _
    // Predicated region
    $region14: #{tpu_custom_call.1} parent=1 // pred_check
      _
    $region15: #{tpu_custom_call.1} parent=1 // pred_check_branch
      %131 = sbr.rel (0) target = $region17
    $region16: #{tpu_custom_call.1} parent=1 // pred_region
      %132 = dma.done [#allocation3], 128
    $region17: #{tpu_custom_call.1} parent=1 // pred_fallthru
      _
    %133 = vsyncpa [#allocation3], 1

</llo_original>
